<compile_context>
chip_gen: v6e
topology: v6e:2x2x1
jax: 0.10.0
libtpu: 0.0.40
codegen_flags: <defaults>
</compile_context>

<pallas_src>
import functools
import math

import jax
import jax.numpy as jnp
from jax.experimental import pallas as pl
from jax.experimental.pallas import tpu as pltpu


def _round_up(n, m):
    return ((n + m - 1) // m) * m


def _sine_layer_kernel(x_ref, w_ref, b_ref, o_ref, *, omega_0):
    # MXU matmul (f32 accumulate) + bias + omega scale (VPU filler) + sin (EUP).
    acc = jnp.dot(x_ref[...], w_ref[...], preferred_element_type=jnp.float32)
    acc = (acc + b_ref[...]) * omega_0
    o_ref[...] = jnp.sin(acc).astype(o_ref.dtype)


def init_sine_layer_params(key, in_feature, out_feature, is_first=False,
                           omega_0=4.0):
    """Mirrors the PyTorch module's init_weights(), but stores the weight
    directly in [in_feature, out_feature] ("pre-transposed") layout so the
    forward pass never transposes.  Per-element uniform init is layout
    agnostic, so the distribution matches nn.Linear + init_weights()."""
    kw, kb = jax.random.split(key)
    if is_first:
        bound_w = 1.0 / in_feature
    else:
        bound_w = math.sqrt(6.0 / in_feature) / omega_0
    w_t = jax.random.uniform(kw, (in_feature, out_feature), jnp.float32,
                             minval=-bound_w, maxval=bound_w)
    # nn.Linear default bias init (not overridden by the module).
    bound_b = 1.0 / math.sqrt(in_feature)
    bias = jax.random.uniform(kb, (out_feature,), jnp.float32,
                              minval=-bound_b, maxval=bound_b)
    return w_t, bias


def prepare_sine_layer_params(w_t, bias):
    """One-time (init-time) zero-padding of the output dim to a multiple of 128
    so the kernel's output stores are lane-dense.  Call once, outside the hot
    loop; sine_layer() also pads lazily if handed unpadded params."""
    _, out_f = w_t.shape
    out_fp = _round_up(out_f, 128)
    if out_fp != out_f:
        w_t = jnp.pad(w_t, ((0, 0), (0, out_fp - out_f)))
        bias = jnp.pad(bias, (0, out_fp - out_f))
    return w_t, bias, out_f


def sine_layer(x, w_t, bias, omega_0=4.0, *, out_features=None, tile_m=512,
               compute_dtype=None, vmem_budget_bytes=48 << 20):
    """x: [M, in_feature]; w_t: [in_feature, out_feature(_padded)];
    bias: [out_feature(_padded)].  Returns sin(omega_0 * (x @ w_t + bias)),
    sliced back to `out_features` columns (defaults to w_t's width)."""
    M, in_f = x.shape
    in_f_w, out_f_given = w_t.shape
    assert in_f == in_f_w, "x feature dim must match W^T leading dim"
    out_f = out_f_given if out_features is None else out_features

    # Lane-dense output width (no-op if prepare_sine_layer_params already ran).
    out_fp = _round_up(out_f_given, 128)
    if out_fp != out_f_given:
        w_t = jnp.pad(w_t, ((0, 0), (0, out_fp - out_f_given)))
        bias = jnp.pad(bias, (0, out_fp - out_f_given))
    b2d = bias.astype(jnp.float32).reshape(1, out_fp)

    out_dtype = x.dtype
    if compute_dtype is not None:
        # Optional bf16 matmul inputs (MXU / HBM win on v6e+). Accumulation,
        # bias, omega scaling and sin stay in f32.  Numerics-sensitive for deep
        # SIRENs -- validate before enabling.
        x = x.astype(compute_dtype)
        w_t = w_t.astype(compute_dtype)
    x_item = jnp.dtype(x.dtype).itemsize
    w_item = jnp.dtype(w_t.dtype).itemsize
    out_item = jnp.dtype(out_dtype).itemsize

    # ---- M tiling: large, 8-aligned tiles; shrink to fit the VMEM budget. ----
    tm = max(8, min(_round_up(max(tile_m, 8), 8), _round_up(M, 8)))

    def vmem_estimate(t):
        # Conservative: count every operand double-buffered even though the
        # constant-index W^T / bias blocks are revisited, not re-fetched.
        return 2 * (t * in_f * x_item + in_f * out_fp * w_item
                    + out_fp * 4 + t * out_fp * out_item)

    while tm > 8 and vmem_estimate(tm) > vmem_budget_bytes:
        tm = max(8, _round_up(tm // 2, 8))

    # NOTE: if W^T alone outgrows the VMEM budget (very wide SIREN layers),
    # this kernel would need a K/N grid axis with a VMEM f32 accumulator and
    # pl.when init/finalize; not needed for typical SIREN widths.

    # v7x has 2 TensorCores: keep >= 2 steps on the "parallel" M axis whenever
    # the batch is big enough to split.
    if M > 8 and pl.cdiv(M, tm) < 2:
        tm = max(8, _round_up(pl.cdiv(M, 2), 8))

    M_p = _round_up(M, tm)
    if M_p != M:
        # Zero-pad the ragged tail; padded rows are computed and sliced off.
        x = jnp.pad(x, ((0, M_p - M), (0, 0)))
    grid_m = M_p // tm

    vmem_limit = int(max(32 << 20, min(vmem_estimate(tm) + (4 << 20), 64 << 20)))

    kernel = functools.partial(_sine_layer_kernel, omega_0=float(omega_0))

    out_p = pl.pallas_call(
        kernel,
        out_shape=jax.ShapeDtypeStruct((M_p, out_fp), out_dtype),
        grid_spec=pltpu.PrefetchScalarGridSpec(
            num_scalar_prefetch=0,
            grid=(grid_m,),
            in_specs=[
                pl.BlockSpec((tm, in_f), lambda i: (i, 0)),      # x row tile
                pl.BlockSpec((in_f, out_fp), lambda i: (0, 0)),  # W^T (resident)
                pl.BlockSpec((1, out_fp), lambda i: (0, 0)),     # bias (resident)
            ],
            out_specs=pl.BlockSpec((tm, out_fp), lambda i: (i, 0)),
        ),
        compiler_params=pltpu.CompilerParams(
            dimension_semantics=("parallel",),
            vmem_limit_bytes=vmem_limit,
        ),
        cost_estimate=pl.CostEstimate(
            flops=2 * M_p * in_f * out_fp,
            transcendentals=M_p * out_fp,
            bytes_accessed=(M_p * in_f * x_item + in_f * out_fp * w_item
                            + out_fp * 4 + M_p * out_fp * out_item),
        ),
    )(x, w_t, b2d)

    # Strip row padding and lane padding (no-op slices when already aligned).
    return out_p[:M, :out_f]


if __name__ == "__main__":
    key = jax.random.PRNGKey(0)
    k_x1, k_p1, k_x2, k_p2 = jax.random.split(key, 4)
    omega_0 = 4.0

    # Case 1: small shapes consistent with the module; params prepared once
    # (padded to lane width) outside the hot path.
    batch, in_feature, out_feature = 16, 32, 32
    x1 = jax.random.normal(k_x1, (batch, in_feature), jnp.float32)
    w_t1, bias1 = init_sine_layer_params(
        k_p1, in_feature, out_feature, is_first=False, omega_0=omega_0)
    w_t1p, bias1p, _ = prepare_sine_layer_params(w_t1, bias1)
    out1 = jax.block_until_ready(
        sine_layer(x1, w_t1p, bias1p, omega_0=omega_0, out_features=out_feature))
    ref1 = jnp.sin(omega_0 * (x1 @ w_t1 + bias1))
    assert out1.shape == (batch, out_feature)
    assert jnp.allclose(out1, ref1, atol=1e-5, rtol=1e-5)

    # Case 2: ragged batch + non-128 width exercises the cdiv / padded-tail and
    # lazy lane-padding paths.
    batch2, in2, out2 = 13, 32, 48
    x2 = jax.random.normal(k_x2, (batch2, in2), jnp.float32)
    w_t2, bias2 = init_sine_layer_params(
        k_p2, in2, out2, is_first=True, omega_0=omega_0)
    out2_ = jax.block_until_ready(sine_layer(x2, w_t2, bias2, omega_0=omega_0))
    ref2 = jnp.sin(omega_0 * (x2 @ w_t2 + bias2))
    assert out2_.shape == (batch2, out2)
    assert jnp.allclose(out2_, ref2, atol=1e-5, rtol=1e-5)

    print("KERNEL_OK")
</pallas_src>

<mosaic_0001>
module attributes {stable_mosaic.version = 11 : i64} {
  func.func @_sine_layer_kernel(%arg0: i32, %arg1: memref<8x32xf32, #tpu.memory_space<vmem>>, %arg2: memref<32x128xf32, #tpu.memory_space<vmem>>, %arg3: memref<1x128xf32, #tpu.memory_space<vmem>>, %arg4: memref<8x128xf32, #tpu.memory_space<vmem>>) attributes {dimension_semantics = [#tpu.dimension_semantics<parallel>], iteration_bounds = array<i64: 2>, scalar_prefetch = 0 : i64, scratch_operands = 0 : i64, tpu.core_type = #tpu.core_type<tc>, window_params = [{transform_indices = @transform_0, window_bounds = array<i64: 8, 32>}, {pipeline_mode = #tpu.pipeline_mode<synchronous>, transform_indices = @transform_1, window_bounds = array<i64: 32, 128>}, {pipeline_mode = #tpu.pipeline_mode<synchronous>, transform_indices = @transform_2, window_bounds = array<i64: 1, 128>}, {transform_indices = @transform_3, window_bounds = array<i64: 8, 128>}]} {
    %c0 = arith.constant 0 : index
    %c0_0 = arith.constant 0 : index
    %0 = vector.load %arg1[%c0, %c0_0] : memref<8x32xf32, #tpu.memory_space<vmem>>, vector<8x32xf32>
    %c0_1 = arith.constant 0 : index
    %c0_2 = arith.constant 0 : index
    %1 = vector.load %arg2[%c0_1, %c0_2] : memref<32x128xf32, #tpu.memory_space<vmem>>, vector<32x128xf32>
    %cst = arith.constant dense<0.000000e+00> : vector<8x128xf32>
    %2 = tpu.matmul %0, %1, %cst {dimension_numbers = #tpu.dot_dimension_numbers<[1], [0], [0], [1], [0, 0, 1, 1], [], []>} : vector<8x32xf32>, vector<32x128xf32>, vector<8x128xf32> -> vector<8x128xf32>
    %c0_3 = arith.constant 0 : index
    %c0_4 = arith.constant 0 : index
    %3 = vector.load %arg3[%c0_3, %c0_4] : memref<1x128xf32, #tpu.memory_space<vmem>>, vector<1x128xf32>
    %4 = vector.broadcast %3 : vector<1x128xf32> to vector<8x128xf32>
    %5 = arith.addf %2, %4 : vector<8x128xf32>
    %cst_5 = arith.constant 4.000000e+00 : f32
    %6 = vector.broadcast %cst_5 : f32 to vector<8x128xf32>
    %7 = arith.mulf %5, %6 : vector<8x128xf32>
    %8 = math.sin %7 : vector<8x128xf32>
    %c0_6 = arith.constant 0 : index
    %c0_7 = arith.constant 0 : index
    %9 = vector.load %arg4[%c0_6, %c0_7] : memref<8x128xf32, #tpu.memory_space<vmem>>, vector<8x128xf32>
    tpu.vector_store %arg4[%c0_6, %c0_7], %8 {strides = array<i32>} : memref<8x128xf32, #tpu.memory_space<vmem>>, vector<8x128xf32>,
    return
  }
  func.func @transform_0(%arg0: i32) -> (i32, i32) {
    %c0_i32 = arith.constant 0 : i32
    %c0_i32_0 = arith.constant 0 : i32
    return %arg0, %c0_i32 : i32, i32
  }
  func.func @transform_1(%arg0: i32) -> (i32, i32) {
    %c0_i32 = arith.constant 0 : i32
    %c0_i32_0 = arith.constant 0 : i32
    %c0_i32_1 = arith.constant 0 : i32
    return %c0_i32, %c0_i32_0 : i32, i32
  }
  func.func @transform_2(%arg0: i32) -> (i32, i32) {
    %c0_i32 = arith.constant 0 : i32
    %c0_i32_0 = arith.constant 0 : i32
    %c0_i32_1 = arith.constant 0 : i32
    return %c0_i32, %c0_i32_0 : i32, i32
  }
  func.func @transform_3(%arg0: i32) -> (i32, i32) {
    %c0_i32 = arith.constant 0 : i32
    %c0_i32_0 = arith.constant 0 : i32
    return %arg0, %c0_i32 : i32, i32
  }
}

</mosaic_0001>

<llo_original>
// kernel: tpu_custom_call.1
$region0: #{tpu_custom_call.1}
  #allocation0 [shape = 'u32[]', space=smem, size = 0x4, offset = 0x4, fixed_abs, tag = 'smem constant byte address 0x4 - core index']
  #allocation1 [shape = 'u32[144,128]{1,0:T(1,128)}', space=vmem, size = 0x12000, scoped, tag = 'internal scratch']
  %s0 = inlined_call_operand.hbm [shape: f32[16,32], index: 0, kind: input, shape index: {}]
  %s1 = inlined_call_operand.hbm [shape: f32[32,128], index: 1, kind: input, shape index: {}]
  %s2 = inlined_call_operand.vmem [shape: f32[1,128], index: 2, kind: input, shape index: {}]
  %s3 = inlined_call_operand.hbm [shape: f32[16,128], index: 3, kind: output, shape index: {}]
  %s4 = sld [smem:[#allocation0]]
  $region53: #{tpu_custom_call.1} parent=0
    _
  %s6 = ssub.s32 1, %s4
  %s7 = scalar_select 0, %s6, %s4
  $region1: #{tpu_custom_call.1} parent=0
    #allocation2 [shape = 'u8[8192]{0}', space=vmem, size = 0x2000, scoped, tag = 'input window, operand 0']
    #allocation3 [shape = 's32[2]{0}', space=sflag, size = 0x8, scoped, tag = 'scoped memory for tpu_custom_call.1']
    #allocation4 [shape = 's32[2]{0}', space=sflag, size = 0x8, scoped, tag = 'scoped memory for tpu_custom_call.1']
    #allocation5 [shape = 'u8[16384]{0}', space=vmem, size = 0x4000, scoped, tag = 'input window, operand 1, single buffered']
    #allocation6 [shape = 's32[1]{0}', space=sflag, size = 0x4, scoped, tag = 'scoped memory for tpu_custom_call.1']
    #allocation7 [shape = 'u8[8192]{0}', space=vmem, size = 0x2000, scoped, tag = 'output window, operand 0']
    %8 = vsyncpa [#allocation3], 0
    %s9 = scalar_lea.sflag [#allocation3], 1
    %10 = vsyncpa %s9, 0
    %11 = vsyncpa [#allocation6], 0
    %12 = vsyncpa [#allocation4], 0
    %s13 = scalar_lea.sflag [#allocation4], 1
    %14 = vsyncpa %s13, 0
    loop: start=0, step=1, limit=4
    $region2: #{tpu_custom_call.1} parent=1 // loop_pre_header
      _
    $region3: #{tpu_custom_call.1} parent=1 // loop_header
      %s16 = sphi 0, %s20
      %p17 = scmp.ge.s32.totalorder %s16, 4
      %s26 = sphi 0, %s28
      %s29 = sphi 0, %s26
      %s30 = sphi 0, %s29
      %s46 = sphi 0, %s30
      %s50 = sphi 0, %s50
      %s52 = sphi 0, %s50
      %s53 = sphi 0, %s52
      %s67 = sphi 0, %s53
      %s71 = sphi 0, %s71
      %s73 = sphi 0, %s71
      %s74 = sphi 0, %s73
      %s88 = sphi 0, %s74
      %s94 = sphi 0, %s96
      %s97 = sphi 0, %s94
      %s98 = sphi 0, %s97
      %s114 = sphi 0, %s98
    $region4: #{tpu_custom_call.1} parent=1 // loop_header_branch
      %19 = sbr.rel (%p17) target = $region8
    $region5: #{tpu_custom_call.1} parent=1 // loop_body
      %s21 = ssub.s32 %s16, 1
      %s22 = ssub.s32 %s16, 2
      %s23 = sadd.s32 %s16, 1
      %s24 = ssub.s32 %s16, %s23
      %p25 = scmp.eq.s32.totalorder %s24, 0
      %s27 = sadd.s32 %s26, 1
      %s28 = scalar_select %p25, %s26, %s27
      %p31 = pneg %p25
      %p32 = scmp.eq.s32.totalorder %s16, 1
      %p33 = por %p31, %p32
      %p34 = scmp.ne.s32.totalorder %s26, %s29
      %p35 = scmp.eq.s32.totalorder %s16, 0
      %p36 = por %p34, %p35
      %p37 = scmp.ne.s32.totalorder %s26, %s29
      %p38 = scmp.eq.s32.totalorder %s21, 1
      %p39 = por %p37, %p38
      %p40 = scmp.ne.s32.totalorder %s29, %s30
      %p41 = scmp.eq.s32.totalorder %s21, 0
      %p42 = por %p40, %p41
      %p43 = scmp.ne.s32.totalorder %s29, %s30
      %p44 = scmp.eq.s32.totalorder %s22, 1
      %p45 = por %p43, %p44
      %p47 = scmp.ne.s32.totalorder %s30, %s46
      %p48 = scmp.eq.s32.totalorder %s22, 0
      %p49 = por %p47, %p48
      %s51 = sadd.s32 %s50, 1
      %p54 = scmp.eq.s32.totalorder %s16, 1
      %p55 = scmp.ne.s32.totalorder %s50, %s52
      %p56 = scmp.eq.s32.totalorder %s16, 0
      %p57 = por %p55, %p56
      %p58 = scmp.ne.s32.totalorder %s50, %s52
      %p59 = scmp.eq.s32.totalorder %s21, 1
      %p60 = por %p58, %p59
      %p61 = scmp.ne.s32.totalorder %s52, %s53
      %p62 = scmp.eq.s32.totalorder %s21, 0
      %p63 = por %p61, %p62
      %p64 = scmp.ne.s32.totalorder %s52, %s53
      %p65 = scmp.eq.s32.totalorder %s22, 1
      %p66 = por %p64, %p65
      %p68 = scmp.ne.s32.totalorder %s53, %s67
      %p69 = scmp.eq.s32.totalorder %s22, 0
      %p70 = por %p68, %p69
      %s72 = sadd.s32 %s71, 1
      %p75 = scmp.eq.s32.totalorder %s16, 1
      %p76 = scmp.ne.s32.totalorder %s71, %s73
      %p77 = scmp.eq.s32.totalorder %s16, 0
      %p78 = por %p76, %p77
      %p79 = scmp.ne.s32.totalorder %s71, %s73
      %p80 = scmp.eq.s32.totalorder %s21, 1
      %p81 = por %p79, %p80
      %p82 = scmp.ne.s32.totalorder %s73, %s74
      %p83 = scmp.eq.s32.totalorder %s21, 0
      %p84 = por %p82, %p83
      %p85 = scmp.ne.s32.totalorder %s73, %s74
      %p86 = scmp.eq.s32.totalorder %s22, 1
      %p87 = por %p85, %p86
      %p89 = scmp.ne.s32.totalorder %s74, %s88
      %p90 = scmp.eq.s32.totalorder %s22, 0
      %p91 = por %p89, %p90
      %s92 = ssub.s32 %s16, %s23
      %p93 = scmp.eq.s32.totalorder %s92, 0
      %s95 = sadd.s32 %s94, 1
      %s96 = scalar_select %p93, %s94, %s95
      %p99 = pneg %p93
      %p100 = scmp.eq.s32.totalorder %s16, 1
      %p101 = por %p99, %p100
      %p102 = scmp.ne.s32.totalorder %s94, %s97
      %p103 = scmp.eq.s32.totalorder %s16, 0
      %p104 = por %p102, %p103
      %p105 = scmp.ne.s32.totalorder %s94, %s97
      %p106 = scmp.eq.s32.totalorder %s21, 1
      %p107 = por %p105, %p106
      %p108 = scmp.ne.s32.totalorder %s97, %s98
      %p109 = scmp.eq.s32.totalorder %s21, 0
      %p110 = por %p108, %p109
      %p111 = scmp.ne.s32.totalorder %s97, %s98
      %p112 = scmp.eq.s32.totalorder %s22, 1
      %p113 = por %p111, %p112
      %p115 = scmp.ne.s32.totalorder %s98, %s114
      %p116 = scmp.eq.s32.totalorder %s22, 0
      %p117 = por %p115, %p116
      %p118 = scmp.le.s32.totalorder 1, %s16
      %p119 = scmp.lt.s32.totalorder %s16, 3
      %p120 = pnand %p118, %p119
      %p121 = pneg %p120
      // Predicated region
      $region9: #{tpu_custom_call.1} parent=5 // pred_check
        _
      $region10: #{tpu_custom_call.1} parent=5 // pred_check_branch
        %123 = sbr.rel (%p120) target = $region12
      $region11: #{tpu_custom_call.1} parent=5 // pred_region
        %s124 = ssub.s32 %s16, 1
        // Predicated region
        $region13: #{tpu_custom_call.1} parent=11 // pred_check
          %p125 = pneg %p63
        $region14: #{tpu_custom_call.1} parent=11 // pred_check_branch
          %127 = sbr.rel (%p125) target = $region16
        $region15: #{tpu_custom_call.1} parent=11 // pred_region
          %s129 = ssub.s32 512, 512
          %130 = vsyncadd [#allocation6], %s129
          %s131 = sshll.u32 [#allocation5], 4
          %s132 = int_to_ptr.vmem [resolvable:$true] %s131
          %137 = dma.hbm_to_vmem [thread:$0]  %s1, 512, %s132, [#allocation6], 128, 128, 8
        $region16: #{tpu_custom_call.1} parent=11 // pred_fallthru
          _
        // Predicated region
        $region17: #{tpu_custom_call.1} parent=11 // pred_check
          %p138 = pneg %p84
        $region18: #{tpu_custom_call.1} parent=11 // pred_check_branch
          %140 = sbr.rel (%p138) target = $region20
        $region19: #{tpu_custom_call.1} parent=11 // pred_region
          _
        $region20: #{tpu_custom_call.1} parent=11 // pred_fallthru
          _
      $region12: #{tpu_custom_call.1} parent=5 // pred_fallthru
        _
      %p141 = scmp.lt.s32.totalorder %s16, 2
      // Predicated region
      $region21: #{tpu_custom_call.1} parent=5 // pred_check
        %p142 = pneg %p141
      $region22: #{tpu_custom_call.1} parent=5 // pred_check_branch
        %144 = sbr.rel (%p142) target = $region24
      $region23: #{tpu_custom_call.1} parent=5 // pred_region
        // Predicated region
        $region25: #{tpu_custom_call.1} parent=23 // pred_check
          %p145 = pneg %p36
        $region26: #{tpu_custom_call.1} parent=23 // pred_check_branch
          %147 = sbr.rel (%p145) target = $region28
        $region27: #{tpu_custom_call.1} parent=23 // pred_region
          %s148 = sand.u32 %s26, 1
          %s149 = scalar_lea.sflag [#allocation3], %s148
          %s150 = sand.u32 %s26, 1
          %s151 = smul.addr %s150, 8
          %s152 = scalar_lea.vmem [#allocation2], %s151
          %s154 = ssub.s32 128, 128
          %155 = vsyncadd %s149, %s154
          %s156 = smul.addr %s16, 128
          %s157 = scalar_lea.hbm %s0, %s156
          %s159 = sshll.u32 %s152, 4
          %s160 = int_to_ptr.vmem [resolvable:$true] %s159
          %162 = dma.hbm_to_vmem [thread:$0]  %s157, 128, %s160, %s149
        $region28: #{tpu_custom_call.1} parent=23 // pred_fallthru
          _
      $region24: #{tpu_custom_call.1} parent=5 // pred_fallthru
        _
      %p163 = scmp.le.s32.totalorder 1, %s16
      %p164 = scmp.lt.s32.totalorder %s16, 3
      %p165 = pnand %p163, %p164
      %p166 = pneg %p165
      // Predicated region
      $region29: #{tpu_custom_call.1} parent=5 // pred_check
        _
      $region30: #{tpu_custom_call.1} parent=5 // pred_check_branch
        %168 = sbr.rel (%p165) target = $region32
      $region31: #{tpu_custom_call.1} parent=5 // pred_region
        %s169 = ssub.s32 %s16, 1
        %s170 = sand.u32 %s29, 1
        %s171 = scalar_lea.sflag [#allocation3], %s170
        %s172 = sand.u32 %s29, 1
        %s173 = smul.addr %s172, 8
        %s174 = scalar_lea.vmem [#allocation2], %s173
        // Predicated region
        $region33: #{tpu_custom_call.1} parent=31 // pred_check
          %p175 = pneg %p42
        $region34: #{tpu_custom_call.1} parent=31 // pred_check_branch
          %177 = sbr.rel (%p175) target = $region36
        $region35: #{tpu_custom_call.1} parent=31 // pred_region
          %178 = dma.done %s171, 128
        $region36: #{tpu_custom_call.1} parent=31 // pred_fallthru
          _
        // Predicated region
        $region37: #{tpu_custom_call.1} parent=31 // pred_check
          %p179 = pneg %p63
        $region38: #{tpu_custom_call.1} parent=31 // pred_check_branch
          %181 = sbr.rel (%p179) target = $region40
        $region39: #{tpu_custom_call.1} parent=31 // pred_region
          %182 = dma.done [#allocation6], 512
        $region40: #{tpu_custom_call.1} parent=31 // pred_fallthru
          _
        %s183 = sand.u32 %s29, 1
        %s184 = scalar_lea.sflag [#allocation3], %s183
        %s185 = sand.u32 %s29, 1
        %s186 = smul.addr %s185, 8
        %s187 = scalar_lea.vmem [#allocation2], %s186
        %p188 = pneg %p42
        %p189 = pneg %p39
        %p190 = pneg %p63
        %p191 = pneg %p60
        %p192 = pneg %p84
        %p193 = pneg %p81
        %p194 = pneg %p110
        %p195 = pneg %p107
        %s196 = sand.u32 %s97, 1
        %s197 = scalar_lea.sflag [#allocation4], %s196
        %s198 = sand.u32 %s97, 1
        %s199 = smul.addr %s198, 8
        %s200 = scalar_lea.vmem [#allocation7], %s199
        %v201 = vld [vmem:[%s174] sm:$0xff]
        %v202 = vld [vmem:[#allocation5] sm:$0xff]
        %v203 = vld [vmem:[#allocation5 + $0x8] sm:$0xff]
        %v204 = vld [vmem:[#allocation5 + $0x10] sm:$0xff]
        %v205 = vld [vmem:[#allocation5 + $0x18] sm:$0xff]
        %v206 = vld [vmem:[%s2] sm:$0x1]
        %v208 = vlaneseq
        %v209 = vshrl.u32 %v208, 7
        %v210 = vsub.s32 0, %v209
        %v211 = vrot.slane %v206, %v210
        %vm213 = vcmask 261120
        %v215 = vsel %vm213, %v201, 0
        %217 = vmatprep.subr.mxu0 0.0
        %218 = vmatpush1.msra.mxu0 0.0
        %219 = vmatprep.subr.mxu0 0.0
        %220 = vmatpush1.msra.mxu0 0.0
        %221 = vmatprep.subr.mxu0 0.0
        %222 = vmatpush1.msra.mxu0 0.0
        %223 = vmatprep.subr.mxu0 0.0
        %224 = vmatpush1.msra.mxu0 0.0
        %225 = vmatprep.subr.mxu0 0.0
        %226 = vmatpush1.msra.mxu0 0.0
        %227 = vmatprep.subr.mxu0 0.0
        %228 = vmatpush1.msra.mxu0 0.0
        %229 = vmatprep.subr.mxu0 0.0
        %230 = vmatpush1.msra.mxu0 0.0
        %231 = vmatprep.subr.mxu0 0.0
        %232 = vmatpush1.msra.mxu0 0.0
        %233 = vmatprep.subr.mxu0 0.0
        %234 = vmatpush1.msra.mxu0 0.0
        %235 = vmatprep.subr.mxu0 0.0
        %236 = vmatpush1.msra.mxu0 0.0
        %237 = vmatprep.subr.mxu0 0.0
        %238 = vmatpush1.msra.mxu0 0.0
        %239 = vmatprep.subr.mxu0 0.0
        %240 = vmatpush1.msra.mxu0 0.0
        %241 = vmatprep.subr.mxu0 0.0
        %242 = vmatpush1.msra.mxu0 %v205
        %243 = vmatprep.subr.mxu0 0.0
        %244 = vmatpush1.msra.mxu0 %v204
        %245 = vmatprep.subr.mxu0 0.0
        %246 = vmatpush1.msra.mxu0 %v203
        %247 = vmatprep.subr.mxu0 0.0
        %248 = vmatpush1.msra.mxu0 %v202
        %249 = vmatprep.subr.mxu0 0.0
        %250 = vmatpush2.msra.mxu0 0.0
        %251 = vmatprep.subr.mxu0 0.0
        %252 = vmatpush2.msra.mxu0 0.0
        %253 = vmatprep.subr.mxu0 0.0
        %254 = vmatpush2.msra.mxu0 0.0
        %255 = vmatprep.subr.mxu0 0.0
        %256 = vmatpush2.msra.mxu0 0.0
        %257 = vmatprep.subr.mxu0 0.0
        %258 = vmatpush2.msra.mxu0 0.0
        %259 = vmatprep.subr.mxu0 0.0
        %260 = vmatpush2.msra.mxu0 0.0
        %261 = vmatprep.subr.mxu0 0.0
        %262 = vmatpush2.msra.mxu0 0.0
        %263 = vmatprep.subr.mxu0 0.0
        %264 = vmatpush2.msra.mxu0 0.0
        %265 = vmatprep.subr.mxu0 0.0
        %266 = vmatpush2.msra.mxu0 0.0
        %267 = vmatprep.subr.mxu0 0.0
        %268 = vmatpush2.msra.mxu0 0.0
        %269 = vmatprep.subr.mxu0 0.0
        %270 = vmatpush2.msra.mxu0 0.0
        %271 = vmatprep.subr.mxu0 0.0
        %272 = vmatpush2.msra.mxu0 0.0
        %273 = vmatprep.subr.mxu0 0.0
        %274 = vmatpush2.msra.mxu0 0.0
        %275 = vmatprep.subr.mxu0 0.0
        %276 = vmatpush2.msra.mxu0 0.0
        %277 = vmatprep.subr.mxu0 0.0
        %278 = vmatpush2.msra.mxu0 0.0
        %279 = vmatprep.subr.mxu0 0.0
        %280 = vmatpush2.msra.mxu0 0.0
        %281 = vmatprep.mubr.f32.mxu0 0.0
        %282 = vmatmul.mubr.f32.gmra.mxu0 %v215
        %v283 = vpop.f32.mrf.mxu0
        %v284 = vadd.f32 %v211, %v283
        %v285 = vpop.f32.mrf.mxu0
        %286 = vdwg.mxu0
        %v287 = vmul.f32 %v284, 4.0
        %v288 = vand.u32 2147483647, %v287
        %vm289 = vcmp.le.f32.partialorder %v288, 0.7853982
        %vm290 = vcmp.lt.s32.totalorder %v287, 0
        %v291 = vand.u32 %v287, 2139095040
        %v292 = vshrl.u32 %v291, 23
        %v293 = vsub.s32 %v292, 127
        %v294 = vand.u32 2147483647, %v287
        %v295 = vand.u32 %v294, 8388607
        %v296 = vor.u32 %v295, 8388608
        %v297 = vsub.s32 0, %v296
        %v298 = vadd.s32 %v293, 1
        %vm299 = vcmp.gt.s32.totalorder %v298, 0
        %v300 = vsel %vm299, %v298, 0
        %v301 = vshrl.u32 %v300, 5
        %v302 = vand.u32 %v300, 31
        %v303 = vsub.s32 32, %v302
        %v304 = vshrl.u32 683565275, %v303
        %v305 = vshll.u32 683565275, %v302
        %v306 = vshrl.u32 2475754826, %v303
        %v307 = vor.u32 %v305, %v306
        %v308 = vshll.u32 2475754826, %v302
        %v309 = vshrl.u32 2131351028, %v303
        %v310 = vor.u32 %v308, %v309
        %v311 = vshll.u32 2131351028, %v302
        %v312 = vshrl.u32 2102212464, %v303
        %v313 = vor.u32 %v311, %v312
        %v314 = vshll.u32 2102212464, %v302
        %v315 = vshrl.u32 920167782, %v303
        %v316 = vor.u32 %v314, %v315
        %v317 = vshll.u32 920167782, %v302
        %v318 = vshrl.u32 1326507024, %v303
        %v319 = vor.u32 %v317, %v318
        %vm320 = vcmp.lt.s32.totalorder %v301, 1
        %vm321 = vcmp.lt.s32.totalorder %v301, 2
        %vm322 = vcmp.lt.s32.totalorder %v301, 3
        %vm323 = vcmp.lt.s32.totalorder %v301, 4
        %v324 = vsel %vm320, %v304, %v307
        %v325 = vsel %vm323, %v313, 2102212464
        %v326 = vsel %vm322, %v310, %v325
        %v327 = vsel %vm321, %v324, %v326
        %v328 = vsel %vm320, %v307, %v310
        %v329 = vsel %vm323, %v316, 920167782
        %v330 = vsel %vm322, %v313, %v329
        %v331 = vsel %vm321, %v328, %v330
        %v332 = vsel %vm320, %v310, %v313
        %v333 = vsel %vm323, %v319, 1326507024
        %v334 = vsel %vm322, %v316, %v333
        %v335 = vsel %vm321, %v332, %v334
        %v336 = vshll.u32 %v296, 8
        %v337 = vmul.u32.u64.compose %v336, %v335
        %v338 = vextract.low.u32 %v337
        %v339 = vextract.high.u32 %v337
        %v340 = vmul.u32.u64.compose %v336, %v331
        %v341 = vextract.low.u32 %v340
        %v342 = vextract.high.u32 %v340
        %v343 = vmul.u32 %v336, %v327
        %v344 = vadd.s32 %v339, %v341
        %vm345 = vc.u32 %v339, %v341
        %v346 = vadd.s32 %v342, 1
        %v347 = vsel %vm345, %v346, %v342
        %v348 = vadd.s32 %v343, %v347
        %v349 = vadd.s32 %v348, 536870912
        %v350 = vshrl.u32 %v349, 30
        %v351 = vshll.u32 %v350, 30
        %v352 = vsub.s32 %v348, %v351
        %vm353 = vcmp.lt.s32.totalorder %v352, 0
        %v354 = vsub.s32 0, %v352
        %v355 = vsel %vm353, %v354, %v352
        %v356 = vclz %v355
        %v357 = vsub.s32 %v356, 2
        %vm358 = vcmp.gt.s32.totalorder 0, %v357
        %v359 = vsel %vm358, 0, %v357
        %v360 = vsub.s32 32, %v359
        %v361 = vshll.u32 %v352, %v359
        %v362 = vshrl.u32 %v344, %v360
        %v363 = vor.u32 %v361, %v362
        %v364 = vsub.s32 4294967266, %v359
        %v365 = vadd.s32 %v364, 127
        %v366 = vshll.u32 %v365, 23
        %v367 = vor.u32 4788187, %v366
        %v368 = vand.u32 2147483647, %v367
        %v370 = vcvt.s32.f32 %v363
        %v371 = vmul.f32 %v370, %v368
        %v372 = vxor.u32 %v371, 2147483648
        %v373 = vsel %vm290, %v372, %v371
        %v374 = vsub.s32 4, %v350
        %v375 = vsel %vm290, %v374, %v350
        %v376 = vsel %vm289, %v287, %v373
        %v377 = vsel %vm289, 0, %v375
        %v378 = vcosq.f32.pop %v376
        %v379 = vsinq.f32.pop %v376
        %vm380 = vweird.f32 %v287
        %v381 = vadd.s32 %v377, 3
        %v382 = vand.u32 %v381, 3
        %vm383 = vcmp.lt.s32.totalorder %v382, 2
        %vm384 = vcmp.eq.s32.totalorder %v382, 0
        %v385 = vxor.u32 %v379, 2147483648
        %v386 = vsel %vm384, %v378, %v385
        %vm387 = vcmp.eq.s32.totalorder %v382, 2
        %v388 = vxor.u32 %v378, 2147483648
        %v389 = vsel %vm387, %v388, %v379
        %v390 = vsel %vm383, %v386, %v389
        %v391 = vsel %vm380, nan, %v390
        %392 = vst [vmem:[%s200] sm:$0xff] %v391
        %s393 = sand.u32 %s97, 1
        %s394 = scalar_lea.sflag [#allocation4], %s393
        %s395 = sand.u32 %s97, 1
        %s396 = smul.addr %s395, 8
        %s397 = scalar_lea.vmem [#allocation7], %s396
        // Predicated region
        $region41: #{tpu_custom_call.1} parent=31 // pred_check
          %p398 = pneg %p107
        $region42: #{tpu_custom_call.1} parent=31 // pred_check_branch
          %400 = sbr.rel (%p398) target = $region44
        $region43: #{tpu_custom_call.1} parent=31 // pred_region
          %s402 = ssub.s32 128, 128
          %403 = vsyncadd %s394, %s402
          %s404 = smul.addr %s21, 128
          %s405 = scalar_lea.hbm %s3, %s404
          %s407 = sshll.u32 %s397, 4
          %s408 = int_to_ptr.vmem [resolvable:$true] %s407
          %410 = dma.vmem_to_hbm [thread:$0]  %s408, 128, %s405, %s394
        $region44: #{tpu_custom_call.1} parent=31 // pred_fallthru
          _
      $region32: #{tpu_custom_call.1} parent=5 // pred_fallthru
        _
      %p411 = scmp.le.s32.totalorder 2, %s16
      // Predicated region
      $region45: #{tpu_custom_call.1} parent=5 // pred_check
        %p412 = pneg %p411
      $region46: #{tpu_custom_call.1} parent=5 // pred_check_branch
        %414 = sbr.rel (%p412) target = $region48
      $region47: #{tpu_custom_call.1} parent=5 // pred_region
        %s415 = ssub.s32 %s16, 2
        // Predicated region
        $region49: #{tpu_custom_call.1} parent=47 // pred_check
          %p416 = pneg %p113
        $region50: #{tpu_custom_call.1} parent=47 // pred_check_branch
          %418 = sbr.rel (%p416) target = $region52
        $region51: #{tpu_custom_call.1} parent=47 // pred_region
          %s419 = sand.u32 %s98, 1
          %s420 = scalar_lea.sflag [#allocation4], %s419
          %s421 = sand.u32 %s98, 1
          %s422 = smul.addr %s421, 8
          %s423 = scalar_lea.vmem [#allocation7], %s422
          %424 = dma.done %s420, 128
        $region52: #{tpu_custom_call.1} parent=47 // pred_fallthru
          _
      $region48: #{tpu_custom_call.1} parent=5 // pred_fallthru
        _
    $region6: #{tpu_custom_call.1} parent=1 // loop_footer
      %s20 = sadd.s32 1, %s16
    $region7: #{tpu_custom_call.1} parent=1 // loop_footer_branch
      %15 = sbr.rel target = $region3
    $region8: #{tpu_custom_call.1} parent=1 // loop_exit
      _
    %425 = vsyncpa [#allocation3], 1
    %s426 = scalar_lea.sflag [#allocation3], 1
    %427 = vsyncpa %s426, 1
    %428 = vsyncpa [#allocation6], 1
    %429 = vsyncpa [#allocation4], 1
    %s430 = scalar_lea.sflag [#allocation4], 1
    %431 = vsyncpa %s430, 1

</llo_original>
